<compile_context>
chip_gen: v5e
topology: v5e:2x2
jax: 0.10.0
libtpu: 0.0.40
codegen_flags: <defaults>
</compile_context>

<pallas_src>
import jax
import jax.numpy as jnp
from jax.experimental import pallas as pl
from jax.experimental.pallas import tpu as pltpu

IN_FEATURES = 10
OUT_FEATURES = 5
K_PAD = 16    # IN + 1 (bias ones-column), padded up to a sublane multiple of 8
N_PAD = 128   # lane-dense output width (one full lane group)


def fused_linear_kernel(x_ref, w_ref, o_ref):
    # Single MXU dot. Bias rides in as the weight row matched to x's ones
    # column, so there is no separate bias ref and no VPU add epilogue.
    # Output is lane-dense (N_PAD = 128) -> unmasked store.
    o_ref[...] = jnp.dot(
        x_ref[...], w_ref[...], preferred_element_type=jnp.float32
    ).astype(o_ref.dtype)


def prepare_params(weight, bias):
    """One-time parameter layout prep (outside the hot call path).

    weight (OUT, IN) and bias (OUT,) fuse into a single (K_PAD, N_PAD) slab:
      rows 0..IN-1        -> W^T
      row  IN             -> bias     (multiplied by x's appended ones column)
      rows IN+1..K_PAD-1  -> 0        (multiplied by x's zero padding)
      cols OUT..N_PAD-1   -> 0        (lane padding; consumer slices/ignores)
    """
    w_fused = jnp.zeros((K_PAD, N_PAD), dtype=weight.dtype)
    w_fused = w_fused.at[:IN_FEATURES, :OUT_FEATURES].set(weight.T)
    w_fused = w_fused.at[IN_FEATURES, :OUT_FEATURES].set(bias)
    return w_fused


def augment_input(x):
    """x (B, IN) -> (B, K_PAD): [x | 1 | 0 ... 0]."""
    B = x.shape[0]
    x_aug = jnp.zeros((B, K_PAD), dtype=x.dtype)
    x_aug = x_aug.at[:, :IN_FEATURES].set(x)
    x_aug = x_aug.at[:, IN_FEATURES].set(1.0)
    return x_aug


def linear_pallas(x, w_fused):
    B = x.shape[0]
    x_aug = augment_input(x)
    # Gridless call: the whole problem fits in VMEM; any grid would be pure
    # per-step overhead (~0.35 us/step) at this size.
    out_padded = pl.pallas_call(
        fused_linear_kernel,
        out_shape=jax.ShapeDtypeStruct((B, N_PAD), x.dtype),
        in_specs=[
            pl.BlockSpec(memory_space=pltpu.MemorySpace.VMEM),
            pl.BlockSpec(memory_space=pltpu.MemorySpace.VMEM),
        ],
        out_specs=pl.BlockSpec(memory_space=pltpu.MemorySpace.VMEM),
    )(x_aug, w_fused)
    # Slice only because the test consumer needs the exact nn.Linear shape;
    # a fused downstream kernel should consume the lane-dense (B, 128) slab.
    return out_padded[:, :OUT_FEATURES]
    # TODO(synk): if B ever scales up (>= ~256 rows), add a leading "parallel"
    # batch grid axis so Mosaic shards across v7x's 2 TCs; at B=8 it is pure
    # per-step overhead.


if __name__ == "__main__":
    key = jax.random.PRNGKey(0)
    kx, kw, kb = jax.random.split(key, 3)

    BATCH = 8

    # Deterministic parameter init, mimicking nn.Linear's U(-1/sqrt(in), 1/sqrt(in)).
    bound = 1.0 / jnp.sqrt(jnp.float32(IN_FEATURES))
    weight = jax.random.uniform(kw, (OUT_FEATURES, IN_FEATURES),
                                dtype=jnp.float32, minval=-bound, maxval=bound)
    bias = jax.random.uniform(kb, (OUT_FEATURES,),
                              dtype=jnp.float32, minval=-bound, maxval=bound)

    x = jax.random.normal(kx, (BATCH, IN_FEATURES), dtype=jnp.float32)

    # One-time fused-parameter layout prep (static params), out of the hot path.
    w_fused = jax.block_until_ready(prepare_params(weight, bias))

    out = jax.block_until_ready(linear_pallas(x, w_fused))

    # Reference check in plain JAX (nn.Linear semantics: x @ W^T + b).
    ref = x @ weight.T + bias
    assert out.shape == (BATCH, OUT_FEATURES)
    assert jnp.allclose(out, ref, atol=1e-5, rtol=1e-5)

    print("KERNEL_OK")
</pallas_src>

<mosaic_0001>
module attributes {stable_mosaic.version = 11 : i64} {
  func.func @fused_linear_kernel(%arg0: memref<8x16xf32, #tpu.memory_space<vmem>>, %arg1: memref<16x128xf32, #tpu.memory_space<vmem>>, %arg2: memref<8x128xf32, #tpu.memory_space<vmem>>) attributes {dimension_semantics = [], scalar_prefetch = 0 : i64, scratch_operands = 0 : i64, tpu.core_type = #tpu.core_type<tc>} {
    %c0 = arith.constant 0 : index
    %c0_0 = arith.constant 0 : index
    %0 = vector.load %arg0[%c0, %c0_0] : memref<8x16xf32, #tpu.memory_space<vmem>>, vector<8x16xf32>
    %c0_1 = arith.constant 0 : index
    %c0_2 = arith.constant 0 : index
    %1 = vector.load %arg1[%c0_1, %c0_2] : memref<16x128xf32, #tpu.memory_space<vmem>>, vector<16x128xf32>
    %cst = arith.constant dense<0.000000e+00> : vector<8x128xf32>
    %2 = tpu.matmul %0, %1, %cst {dimension_numbers = #tpu.dot_dimension_numbers<[1], [0], [0], [1], [0, 0, 1, 1], [], []>} : vector<8x16xf32>, vector<16x128xf32>, vector<8x128xf32> -> vector<8x128xf32>
    %c0_3 = arith.constant 0 : index
    %c0_4 = arith.constant 0 : index
    %3 = vector.load %arg2[%c0_3, %c0_4] : memref<8x128xf32, #tpu.memory_space<vmem>>, vector<8x128xf32>
    tpu.vector_store %arg2[%c0_3, %c0_4], %2 {strides = array<i32>} : memref<8x128xf32, #tpu.memory_space<vmem>>, vector<8x128xf32>,
    return
  }
}

</mosaic_0001>

<llo_original>
// kernel: tpu_custom_call.1
$region0: #{tpu_custom_call.1}
  #allocation0 [shape = 'u32[]', space=smem, size = 0x4, offset = 0x4, fixed_abs, tag = 'smem constant byte address 0x4 - core index']
  #allocation1 [shape = 'u32[72,128]{1,0:T(1,128)}', space=vmem, size = 0x9000, scoped, tag = 'internal scratch']
  %s0 = inlined_call_operand.hbm [shape: f32[8,16], index: 0, kind: input, shape index: {}]
  %s1 = inlined_call_operand.hbm [shape: f32[16,128], index: 1, kind: input, shape index: {}]
  %s2 = inlined_call_operand.hbm [shape: f32[8,128], index: 2, kind: output, shape index: {}]
  %s3 = sld [smem:[#allocation0]]
  $region26: #{tpu_custom_call.1} parent=0
    _
  %s5 = ssub.s32 1, %s3
  %s6 = scalar_select 0, %s5, %s3
  $region1: #{tpu_custom_call.1} parent=0
    #allocation2 [shape = 'u8[4096]{0}', space=vmem, size = 0x1000, scoped, tag = 'input window, operand 0, single buffered']
    #allocation3 [shape = 's32[1]{0}', space=sflag, size = 0x4, scoped, tag = 'scoped memory for tpu_custom_call.1']
    #allocation4 [shape = 's32[1]{0}', space=sflag, size = 0x4, scoped, tag = 'scoped memory for tpu_custom_call.1']
    #allocation5 [shape = 'u8[8192]{0}', space=vmem, size = 0x2000, scoped, tag = 'input window, operand 1, single buffered']
    #allocation6 [shape = 's32[1]{0}', space=sflag, size = 0x4, scoped, tag = 'scoped memory for tpu_custom_call.1']
    #allocation7 [shape = 'u8[4096]{0}', space=vmem, size = 0x1000, scoped, tag = 'output window, operand 0, single buffered']
    %7 = vsyncpa [#allocation3], 0
    %8 = vsyncpa [#allocation6], 0
    %9 = vsyncpa [#allocation4], 0
    // Predicated region
    $region2: #{tpu_custom_call.1} parent=1 // pred_check
      _
    $region3: #{tpu_custom_call.1} parent=1 // pred_check_branch
      %11 = sbr.rel (0) target = $region5
    $region4: #{tpu_custom_call.1} parent=1 // pred_region
      %13 = vsyncadd [#allocation3], 0
      %s15 = sshll.u32 %s0, 4
      %s16 = int_to_ptr.hbm [resolvable:$true] %s15
      %s17 = sshll.u32 [#allocation2], 4
      %s18 = int_to_ptr.vmem [resolvable:$true] %s17
      %20 = dma.hbm_to_vmem [thread:$0]  %s16, 128, %s18, [#allocation3]
    $region5: #{tpu_custom_call.1} parent=1 // pred_fallthru
      _
    // Predicated region
    $region6: #{tpu_custom_call.1} parent=1 // pred_check
      _
    $region7: #{tpu_custom_call.1} parent=1 // pred_check_branch
      %22 = sbr.rel (0) target = $region9
    $region8: #{tpu_custom_call.1} parent=1 // pred_region
      %24 = vsyncadd [#allocation6], 0
      %s25 = sshll.u32 %s1, 4
      %s26 = int_to_ptr.hbm [resolvable:$true] %s25
      %s27 = sshll.u32 [#allocation5], 4
      %s28 = int_to_ptr.vmem [resolvable:$true] %s27
      %33 = dma.hbm_to_vmem [thread:$0]  %s26, 256, %s28, [#allocation6], 128, 128, 8
    $region9: #{tpu_custom_call.1} parent=1 // pred_fallthru
      _
    // Predicated region
    $region10: #{tpu_custom_call.1} parent=1 // pred_check
      _
    $region11: #{tpu_custom_call.1} parent=1 // pred_check_branch
      %35 = sbr.rel (0) target = $region13
    $region12: #{tpu_custom_call.1} parent=1 // pred_region
      %37 = dma.done [#allocation3], 128
    $region13: #{tpu_custom_call.1} parent=1 // pred_fallthru
      _
    // Predicated region
    $region14: #{tpu_custom_call.1} parent=1 // pred_check
      _
    $region15: #{tpu_custom_call.1} parent=1 // pred_check_branch
      %39 = sbr.rel (0) target = $region17
    $region16: #{tpu_custom_call.1} parent=1 // pred_region
      %41 = dma.done [#allocation6], 256
    $region17: #{tpu_custom_call.1} parent=1 // pred_fallthru
      _
    %v42 = vld [vmem:[#allocation2] sm:$0xff]
    %v43 = vld [vmem:[#allocation5] sm:$0xff]
    %v44 = vld [vmem:[#allocation5 + $0x8] sm:$0xff]
    %vm45 = vcmask 130048
    %v47 = vsel %vm45, %v42, 0
    %49 = vmatpush.msra.mxu0 0.0
    %50 = vmatpush.msra.mxu0 0.0
    %51 = vmatpush.msra.mxu0 0.0
    %52 = vmatpush.msra.mxu0 0.0
    %53 = vmatpush.msra.mxu0 0.0
    %54 = vmatpush.msra.mxu0 0.0
    %55 = vmatpush.msra.mxu0 0.0
    %56 = vmatpush.msra.mxu0 0.0
    %57 = vmatpush.msra.mxu0 0.0
    %58 = vmatpush.msra.mxu0 0.0
    %59 = vmatpush.msra.mxu0 0.0
    %60 = vmatpush.msra.mxu0 0.0
    %61 = vmatpush.msra.mxu0 0.0
    %62 = vmatpush.msra.mxu0 0.0
    %63 = vmatpush.msra.mxu0 %v44
    %64 = vmatpush.msra.mxu0 %v43
    %65 = vmatmul.f32.gmra.mxu0 %v47
    %v66 = vpop.f32.mrf.mxu0
    %v67 = vadd.f32 0.0, %v66
    %68 = vdwg.mxu0
    %69 = vst [vmem:[#allocation7] sm:$0xff] %v67
    // Predicated region
    $region18: #{tpu_custom_call.1} parent=1 // pred_check
      _
    $region19: #{tpu_custom_call.1} parent=1 // pred_check_branch
      %71 = sbr.rel (0) target = $region21
    $region20: #{tpu_custom_call.1} parent=1 // pred_region
      %73 = vsyncadd [#allocation4], 0
      %s75 = sshll.u32 [#allocation7], 4
      %s76 = int_to_ptr.vmem [resolvable:$true] %s75
      %s77 = sshll.u32 %s2, 4
      %s78 = int_to_ptr.hbm [resolvable:$true] %s77
      %80 = dma.vmem_to_hbm [thread:$0]  %s76, 128, %s78, [#allocation4]
    $region21: #{tpu_custom_call.1} parent=1 // pred_fallthru
      _
    // Predicated region
    $region22: #{tpu_custom_call.1} parent=1 // pred_check
      _
    $region23: #{tpu_custom_call.1} parent=1 // pred_check_branch
      %82 = sbr.rel (0) target = $region25
    $region24: #{tpu_custom_call.1} parent=1 // pred_region
      %84 = dma.done [#allocation4], 128
    $region25: #{tpu_custom_call.1} parent=1 // pred_fallthru
      _
    %85 = vsyncpa [#allocation3], 1
    %86 = vsyncpa [#allocation6], 1
    %87 = vsyncpa [#allocation4], 1

</llo_original>
